<compile_context>
chip_gen: v5e
topology: v5e:2x2
jax: 0.10.0
libtpu: 0.0.40
codegen_flags: <defaults>
</compile_context>

<pallas_src>
import jax
import jax.numpy as jnp
from jax.experimental import pallas as pl
from jax.experimental.pallas import tpu as pltpu

# ----------------------------- model config ---------------------------------
IN_SIZE = 64          # config['input_window_size']
Z_SIZE = 8            # config['z_size']
TGT_SIZE = 32         # self.w_target_size  (must be <= IN_SIZE)
BATCH = 8

SLAB_LANES = 128      # lane-dense parameter slab width
OUT_LANES = 128       # lane-dense output width (3*TGT_SIZE = 96, padded to 128)
MAX_TILE = 128        # batch rows per grid step


def _round8(x):
    return (x + 7) // 8 * 8


def _build_layout():
    """Static row layout of the packed parameter slab: name -> (row, d_in, d_out)."""
    q4, q2 = TGT_SIZE // 4, TGT_SIZE // 2
    specs = [
        # encoder
        ("ew1", IN_SIZE, IN_SIZE // 2), ("eb1", 1, IN_SIZE // 2),
        ("ew2", IN_SIZE // 2, IN_SIZE // 4), ("eb2", 1, IN_SIZE // 4),
        ("ew3", IN_SIZE // 4, Z_SIZE), ("eb3", 1, Z_SIZE),
        # fused decoder1+decoder2 (for the w1/w2 pass)
        ("fw1", Z_SIZE, 2 * q4), ("fb1", 1, 2 * q4),
        ("fw2", 2 * q4, 2 * q2), ("fb2", 1, 2 * q2),
        ("fw3", 2 * q2, 2 * TGT_SIZE), ("fb3", 1, 2 * TGT_SIZE),
        # standalone decoder2 (for the w3 pass)
        ("d2w1", Z_SIZE, q4), ("d2b1", 1, q4),
        ("d2w2", q4, q2), ("d2b2", 1, q2),
        ("d2w3", q2, TGT_SIZE), ("d2b3", 1, TGT_SIZE),
    ]
    layout, off = {}, 0
    for name, din, dout in specs:
        layout[name] = (off, din, dout)
        off += _round8(din)       # each entry gets sublane-aligned rows
    return layout, _round8(off)


PARAM_LAYOUT, SLAB_ROWS = _build_layout()


# ------------------------------- kernel -------------------------------------
def network_kernel(x_ref, p_ref, out_ref):
    def wslice(name):
        off, din, dout = PARAM_LAYOUT[name]
        return p_ref[pl.ds(off, din), pl.ds(0, dout)]

    def bslice(name):
        off, _, dout = PARAM_LAYOUT[name]
        return p_ref[pl.ds(off, 1), pl.ds(0, dout)]

    def lin(x, w, b):
        return jnp.dot(x, w, preferred_element_type=jnp.float32) + b

    def relu(v):
        return jnp.maximum(v, 0.0)

    # Encoder weights are used twice -> hoist the loads once.
    ew1, eb1 = wslice("ew1"), bslice("eb1")
    ew2, eb2 = wslice("ew2"), bslice("eb2")
    ew3, eb3 = wslice("ew3"), bslice("eb3")

    def encode_tail(h1):
        h2 = relu(lin(h1, ew2, eb2))
        return relu(lin(h2, ew3, eb3))      # ReLU on the latent layer too

    x = x_ref[...]
    z = encode_tail(relu(lin(x, ew1, eb1)))

    # Fused Decoder1 + Decoder2: w12[:, :TGT] == w1, w12[:, TGT:] == w2.
    h = relu(lin(z, wslice("fw1"), bslice("fb1")))
    h = relu(lin(h, wslice("fw2"), bslice("fb2")))
    w12 = jax.nn.sigmoid(lin(h, wslice("fw3"), bslice("fb3")))
    w1 = w12[:, :TGT_SIZE]

    # Re-encode of new_tensor = [w1 | zeros]: the zero columns contribute
    # nothing, so layer 1 reduces to  w1 @ ew1[:TGT_SIZE, :] + eb1.
    z2 = encode_tail(relu(lin(w1, ew1[:TGT_SIZE, :], eb1)))

    # Decoder2 on z2 -> w3
    h = relu(lin(z2, wslice("d2w1"), bslice("d2b1")))
    h = relu(lin(h, wslice("d2w2"), bslice("d2b2")))
    w3 = jax.nn.sigmoid(lin(h, wslice("d2w3"), bslice("d2b3")))

    # Single lane-dense output block: [w1 | w2 | w3 | zero pad] -> 128 lanes.
    pad = jnp.zeros((w3.shape[0], OUT_LANES - 3 * TGT_SIZE), jnp.float32)
    out_ref[...] = jnp.concatenate([w12, w3, pad], axis=-1)


# ------------------------------- wrapper -------------------------------------
@jax.jit
def network_forward(batch, slab):
    n, d_in = batch.shape
    tile = n if n <= MAX_TILE else MAX_TILE
    grid = (pl.cdiv(n, tile),)

    out = pl.pallas_call(
        network_kernel,
        out_shape=jax.ShapeDtypeStruct((n, OUT_LANES), jnp.float32),
        grid_spec=pltpu.PrefetchScalarGridSpec(
            num_scalar_prefetch=0,
            grid=grid,
            in_specs=[
                pl.BlockSpec((tile, d_in), lambda i: (i, 0)),
                # same block every step -> slab stays resident, one DMA
                pl.BlockSpec((SLAB_ROWS, SLAB_LANES), lambda i: (0, 0)),
            ],
            out_specs=pl.BlockSpec((tile, OUT_LANES), lambda i: (i, 0)),
        ),
        compiler_params=pltpu.CompilerParams(
            dimension_semantics=("parallel",)),
    )(batch, slab)

    w1 = out[:, :TGT_SIZE]
    w2 = out[:, TGT_SIZE:2 * TGT_SIZE]
    w3 = out[:, 2 * TGT_SIZE:3 * TGT_SIZE]
    return w1, w2, w3


# ------------------------- deterministic params -------------------------------
def init_linear(key, d_in, d_out):
    kw, kb = jax.random.split(key)
    bound = 1.0 / jnp.sqrt(d_in)
    w = jax.random.uniform(kw, (d_in, d_out), jnp.float32, -bound, bound)
    b = jax.random.uniform(kb, (1, d_out), jnp.float32, -bound, bound)
    return w, b


def init_params(key):
    ENC_DIMS = [IN_SIZE, IN_SIZE // 2, IN_SIZE // 4, Z_SIZE]       # 64->32->16->8
    DEC_DIMS = [Z_SIZE, TGT_SIZE // 4, TGT_SIZE // 2, TGT_SIZE]    # 8->8->16->32
    params = []
    for dims in [ENC_DIMS, DEC_DIMS, DEC_DIMS]:                    # enc, dec1, dec2
        for d_in, d_out in zip(dims[:-1], dims[1:]):
            key, sub = jax.random.split(key)
            w, b = init_linear(sub, d_in, d_out)
            params.extend([w, b])
    return params


def pack_params(params):
    """Pack 18 params (+ fused decoder weights) into one (SLAB_ROWS, 128) slab."""
    (ew1, eb1, ew2, eb2, ew3, eb3,
     d1w1, d1b1, d1w2, d1b2, d1w3, d1b3,
     d2w1, d2b1, d2w2, d2b2, d2w3, d2b3) = params

    q4, q2 = TGT_SIZE // 4, TGT_SIZE // 2
    fw1 = jnp.concatenate([d1w1, d2w1], axis=1)
    fb1 = jnp.concatenate([d1b1, d2b1], axis=1)
    fw2 = jnp.block([[d1w2, jnp.zeros((q4, q2), jnp.float32)],
                     [jnp.zeros((q4, q2), jnp.float32), d2w2]])
    fb2 = jnp.concatenate([d1b2, d2b2], axis=1)
    fw3 = jnp.block([[d1w3, jnp.zeros((q2, TGT_SIZE), jnp.float32)],
                     [jnp.zeros((q2, TGT_SIZE), jnp.float32), d2w3]])
    fb3 = jnp.concatenate([d1b3, d2b3], axis=1)

    entries = {
        "ew1": ew1, "eb1": eb1, "ew2": ew2, "eb2": eb2, "ew3": ew3, "eb3": eb3,
        "fw1": fw1, "fb1": fb1, "fw2": fw2, "fb2": fb2, "fw3": fw3, "fb3": fb3,
        "d2w1": d2w1, "d2b1": d2b1, "d2w2": d2w2, "d2b2": d2b2,
        "d2w3": d2w3, "d2b3": d2b3,
    }
    slab = jnp.zeros((SLAB_ROWS, SLAB_LANES), jnp.float32)
    for name, arr in entries.items():
        off, _, _ = PARAM_LAYOUT[name]
        arr2 = arr if arr.ndim == 2 else arr.reshape(1, -1)
        slab = slab.at[off:off + arr2.shape[0], :arr2.shape[1]].set(arr2)
    return slab


# ----------------------------- pure-JAX reference -----------------------------
def reference_forward(batch, params):
    (ew1, eb1, ew2, eb2, ew3, eb3,
     d1w1, d1b1, d1w2, d1b2, d1w3, d1b3,
     d2w1, d2b1, d2w2, d2b2, d2w3, d2b3) = params

    def enc(x):
        h = jnp.maximum(x @ ew1 + eb1, 0.0)
        h = jnp.maximum(h @ ew2 + eb2, 0.0)
        return jnp.maximum(h @ ew3 + eb3, 0.0)

    def dec(z, w1, b1, w2, b2, w3, b3):
        h = jnp.maximum(z @ w1 + b1, 0.0)
        h = jnp.maximum(h @ w2 + b2, 0.0)
        return jax.nn.sigmoid(h @ w3 + b3)

    z = enc(batch)
    w1 = dec(z, d1w1, d1b1, d1w2, d1b2, d1w3, d1b3)
    w2 = dec(z, d2w1, d2b1, d2w2, d2b2, d2w3, d2b3)
    nt = jnp.zeros_like(batch).at[:, :TGT_SIZE].set(w1)
    w3 = dec(enc(nt), d2w1, d2b1, d2w2, d2b2, d2w3, d2b3)
    return w1, w2, w3


# --------------------------------- main ---------------------------------------
if __name__ == "__main__":
    key = jax.random.PRNGKey(0)
    key_x, key_p = jax.random.split(key)
    batch = jax.random.normal(key_x, (BATCH, IN_SIZE), jnp.float32)
    params = init_params(key_p)
    slab = pack_params(params)

    w1, w2, w3 = network_forward(batch, slab)
    jax.block_until_ready((w1, w2, w3))

    r1, r2, r3 = reference_forward(batch, params)
    assert jnp.allclose(w1, r1, rtol=1e-4, atol=1e-4)
    assert jnp.allclose(w2, r2, rtol=1e-4, atol=1e-4)
    assert jnp.allclose(w3, r3, rtol=1e-4, atol=1e-4)

    print("KERNEL_OK")
</pallas_src>

<mosaic_0001>
module attributes {stable_mosaic.version = 11 : i64} {
  func.func @network_kernel(%arg0: i32, %arg1: memref<8x64xf32, #tpu.memory_space<vmem>>, %arg2: memref<272x128xf32, #tpu.memory_space<vmem>>, %arg3: memref<8x128xf32, #tpu.memory_space<vmem>>) attributes {dimension_semantics = [#tpu.dimension_semantics<parallel>], iteration_bounds = array<i64: 1>, scalar_prefetch = 0 : i64, scratch_operands = 0 : i64, tpu.core_type = #tpu.core_type<tc>, window_params = [{transform_indices = @transform_0, window_bounds = array<i64: 8, 64>}, {pipeline_mode = #tpu.pipeline_mode<synchronous>, transform_indices = @transform_1, window_bounds = array<i64: 272, 128>}, {transform_indices = @transform_2, window_bounds = array<i64: 8, 128>}]} {
    %c0 = arith.constant 0 : index
    %c0_0 = arith.constant 0 : index
    %0 = vector.load %arg2[%c0, %c0_0] : memref<272x128xf32, #tpu.memory_space<vmem>>, vector<64x32xf32>
    %c64 = arith.constant 64 : index
    %c0_1 = arith.constant 0 : index
    %1 = vector.load %arg2[%c64, %c0_1] : memref<272x128xf32, #tpu.memory_space<vmem>>, vector<1x32xf32>
    %c72 = arith.constant 72 : index
    %c0_2 = arith.constant 0 : index
    %2 = vector.load %arg2[%c72, %c0_2] : memref<272x128xf32, #tpu.memory_space<vmem>>, vector<32x16xf32>
    %c104 = arith.constant 104 : index
    %c0_3 = arith.constant 0 : index
    %3 = vector.load %arg2[%c104, %c0_3] : memref<272x128xf32, #tpu.memory_space<vmem>>, vector<1x16xf32>
    %c112 = arith.constant 112 : index
    %c0_4 = arith.constant 0 : index
    %4 = vector.load %arg2[%c112, %c0_4] : memref<272x128xf32, #tpu.memory_space<vmem>>, vector<16x8xf32>
    %c128 = arith.constant 128 : index
    %c0_5 = arith.constant 0 : index
    %5 = vector.load %arg2[%c128, %c0_5] : memref<272x128xf32, #tpu.memory_space<vmem>>, vector<1x8xf32>
    %c0_6 = arith.constant 0 : index
    %c0_7 = arith.constant 0 : index
    %6 = vector.load %arg1[%c0_6, %c0_7] : memref<8x64xf32, #tpu.memory_space<vmem>>, vector<8x64xf32>
    %cst = arith.constant dense<0.000000e+00> : vector<8x32xf32>
    %7 = tpu.matmul %6, %0, %cst {dimension_numbers = #tpu.dot_dimension_numbers<[1], [0], [0], [1], [0, 0, 1, 1], [], []>} : vector<8x64xf32>, vector<64x32xf32>, vector<8x32xf32> -> vector<8x32xf32>
    %8 = vector.broadcast %1 : vector<1x32xf32> to vector<8x32xf32>
    %9 = arith.addf %7, %8 : vector<8x32xf32>
    %cst_8 = arith.constant 0.000000e+00 : f32
    %10 = vector.broadcast %cst_8 : f32 to vector<8x32xf32>
    %11 = arith.maximumf %9, %10 : vector<8x32xf32>
    %cst_9 = arith.constant dense<0.000000e+00> : vector<8x16xf32>
    %12 = tpu.matmul %11, %2, %cst_9 {dimension_numbers = #tpu.dot_dimension_numbers<[1], [0], [0], [1], [0, 0, 1, 1], [], []>} : vector<8x32xf32>, vector<32x16xf32>, vector<8x16xf32> -> vector<8x16xf32>
    %13 = vector.broadcast %3 : vector<1x16xf32> to vector<8x16xf32>
    %14 = arith.addf %12, %13 : vector<8x16xf32>
    %cst_10 = arith.constant 0.000000e+00 : f32
    %15 = vector.broadcast %cst_10 : f32 to vector<8x16xf32>
    %16 = arith.maximumf %14, %15 : vector<8x16xf32>
    %cst_11 = arith.constant dense<0.000000e+00> : vector<8x8xf32>
    %17 = tpu.matmul %16, %4, %cst_11 {dimension_numbers = #tpu.dot_dimension_numbers<[1], [0], [0], [1], [0, 0, 1, 1], [], []>} : vector<8x16xf32>, vector<16x8xf32>, vector<8x8xf32> -> vector<8x8xf32>
    %18 = vector.broadcast %5 : vector<1x8xf32> to vector<8x8xf32>
    %19 = arith.addf %17, %18 : vector<8x8xf32>
    %cst_12 = arith.constant 0.000000e+00 : f32
    %20 = vector.broadcast %cst_12 : f32 to vector<8x8xf32>
    %21 = arith.maximumf %19, %20 : vector<8x8xf32>
    %c136 = arith.constant 136 : index
    %c0_13 = arith.constant 0 : index
    %22 = vector.load %arg2[%c136, %c0_13] : memref<272x128xf32, #tpu.memory_space<vmem>>, vector<8x16xf32>
    %c144 = arith.constant 144 : index
    %c0_14 = arith.constant 0 : index
    %23 = vector.load %arg2[%c144, %c0_14] : memref<272x128xf32, #tpu.memory_space<vmem>>, vector<1x16xf32>
    %cst_15 = arith.constant dense<0.000000e+00> : vector<8x16xf32>
    %24 = tpu.matmul %21, %22, %cst_15 {dimension_numbers = #tpu.dot_dimension_numbers<[1], [0], [0], [1], [0, 0, 1, 1], [], []>} : vector<8x8xf32>, vector<8x16xf32>, vector<8x16xf32> -> vector<8x16xf32>
    %25 = vector.broadcast %23 : vector<1x16xf32> to vector<8x16xf32>
    %26 = arith.addf %24, %25 : vector<8x16xf32>
    %cst_16 = arith.constant 0.000000e+00 : f32
    %27 = vector.broadcast %cst_16 : f32 to vector<8x16xf32>
    %28 = arith.maximumf %26, %27 : vector<8x16xf32>
    %c152 = arith.constant 152 : index
    %c0_17 = arith.constant 0 : index
    %29 = vector.load %arg2[%c152, %c0_17] : memref<272x128xf32, #tpu.memory_space<vmem>>, vector<16x32xf32>
    %c168 = arith.constant 168 : index
    %c0_18 = arith.constant 0 : index
    %30 = vector.load %arg2[%c168, %c0_18] : memref<272x128xf32, #tpu.memory_space<vmem>>, vector<1x32xf32>
    %cst_19 = arith.constant dense<0.000000e+00> : vector<8x32xf32>
    %31 = tpu.matmul %28, %29, %cst_19 {dimension_numbers = #tpu.dot_dimension_numbers<[1], [0], [0], [1], [0, 0, 1, 1], [], []>} : vector<8x16xf32>, vector<16x32xf32>, vector<8x32xf32> -> vector<8x32xf32>
    %32 = vector.broadcast %30 : vector<1x32xf32> to vector<8x32xf32>
    %33 = arith.addf %31, %32 : vector<8x32xf32>
    %cst_20 = arith.constant 0.000000e+00 : f32
    %34 = vector.broadcast %cst_20 : f32 to vector<8x32xf32>
    %35 = arith.maximumf %33, %34 : vector<8x32xf32>
    %c176 = arith.constant 176 : index
    %c0_21 = arith.constant 0 : index
    %36 = vector.load %arg2[%c176, %c0_21] : memref<272x128xf32, #tpu.memory_space<vmem>>, vector<32x64xf32>
    %c208 = arith.constant 208 : index
    %c0_22 = arith.constant 0 : index
    %37 = vector.load %arg2[%c208, %c0_22] : memref<272x128xf32, #tpu.memory_space<vmem>>, vector<1x64xf32>
    %cst_23 = arith.constant dense<0.000000e+00> : vector<8x64xf32>
    %38 = tpu.matmul %35, %36, %cst_23 {dimension_numbers = #tpu.dot_dimension_numbers<[1], [0], [0], [1], [0, 0, 1, 1], [], []>} : vector<8x32xf32>, vector<32x64xf32>, vector<8x64xf32> -> vector<8x64xf32>
    %39 = vector.broadcast %37 : vector<1x64xf32> to vector<8x64xf32>
    %40 = arith.addf %38, %39 : vector<8x64xf32>
    %41 = arith.negf %40 : vector<8x64xf32>
    %42 = math.exp %41 : vector<8x64xf32>
    %cst_24 = arith.constant 1.000000e+00 : f32
    %43 = vector.broadcast %cst_24 : f32 to vector<8x64xf32>
    %44 = arith.addf %43, %42 : vector<8x64xf32>
    %45 = arith.divf %43, %44 : vector<8x64xf32>
    %46 = vector.extract_strided_slice %45 {offsets = [0, 0], sizes = [8, 32], strides = [1, 1]} : vector<8x64xf32> to vector<8x32xf32>
    %47 = vector.extract_strided_slice %0 {offsets = [0, 0], sizes = [32, 32], strides = [1, 1]} : vector<64x32xf32> to vector<32x32xf32>
    %cst_25 = arith.constant dense<0.000000e+00> : vector<8x32xf32>
    %48 = tpu.matmul %46, %47, %cst_25 {dimension_numbers = #tpu.dot_dimension_numbers<[1], [0], [0], [1], [0, 0, 1, 1], [], []>} : vector<8x32xf32>, vector<32x32xf32>, vector<8x32xf32> -> vector<8x32xf32>
    %49 = vector.broadcast %1 : vector<1x32xf32> to vector<8x32xf32>
    %50 = arith.addf %48, %49 : vector<8x32xf32>
    %cst_26 = arith.constant 0.000000e+00 : f32
    %51 = vector.broadcast %cst_26 : f32 to vector<8x32xf32>
    %52 = arith.maximumf %50, %51 : vector<8x32xf32>
    %cst_27 = arith.constant dense<0.000000e+00> : vector<8x16xf32>
    %53 = tpu.matmul %52, %2, %cst_27 {dimension_numbers = #tpu.dot_dimension_numbers<[1], [0], [0], [1], [0, 0, 1, 1], [], []>} : vector<8x32xf32>, vector<32x16xf32>, vector<8x16xf32> -> vector<8x16xf32>
    %54 = vector.broadcast %3 : vector<1x16xf32> to vector<8x16xf32>
    %55 = arith.addf %53, %54 : vector<8x16xf32>
    %cst_28 = arith.constant 0.000000e+00 : f32
    %56 = vector.broadcast %cst_28 : f32 to vector<8x16xf32>
    %57 = arith.maximumf %55, %56 : vector<8x16xf32>
    %cst_29 = arith.constant dense<0.000000e+00> : vector<8x8xf32>
    %58 = tpu.matmul %57, %4, %cst_29 {dimension_numbers = #tpu.dot_dimension_numbers<[1], [0], [0], [1], [0, 0, 1, 1], [], []>} : vector<8x16xf32>, vector<16x8xf32>, vector<8x8xf32> -> vector<8x8xf32>
    %59 = vector.broadcast %5 : vector<1x8xf32> to vector<8x8xf32>
    %60 = arith.addf %58, %59 : vector<8x8xf32>
    %cst_30 = arith.constant 0.000000e+00 : f32
    %61 = vector.broadcast %cst_30 : f32 to vector<8x8xf32>
    %62 = arith.maximumf %60, %61 : vector<8x8xf32>
    %c216 = arith.constant 216 : index
    %c0_31 = arith.constant 0 : index
    %63 = vector.load %arg2[%c216, %c0_31] : memref<272x128xf32, #tpu.memory_space<vmem>>, vector<8x8xf32>
    %c224 = arith.constant 224 : index
    %c0_32 = arith.constant 0 : index
    %64 = vector.load %arg2[%c224, %c0_32] : memref<272x128xf32, #tpu.memory_space<vmem>>, vector<1x8xf32>
    %cst_33 = arith.constant dense<0.000000e+00> : vector<8x8xf32>
    %65 = tpu.matmul %62, %63, %cst_33 {dimension_numbers = #tpu.dot_dimension_numbers<[1], [0], [0], [1], [0, 0, 1, 1], [], []>} : vector<8x8xf32>, vector<8x8xf32>, vector<8x8xf32> -> vector<8x8xf32>
    %66 = vector.broadcast %64 : vector<1x8xf32> to vector<8x8xf32>
    %67 = arith.addf %65, %66 : vector<8x8xf32>
    %cst_34 = arith.constant 0.000000e+00 : f32
    %68 = vector.broadcast %cst_34 : f32 to vector<8x8xf32>
    %69 = arith.maximumf %67, %68 : vector<8x8xf32>
    %c232 = arith.constant 232 : index
    %c0_35 = arith.constant 0 : index
    %70 = vector.load %arg2[%c232, %c0_35] : memref<272x128xf32, #tpu.memory_space<vmem>>, vector<8x16xf32>
    %c240 = arith.constant 240 : index
    %c0_36 = arith.constant 0 : index
    %71 = vector.load %arg2[%c240, %c0_36] : memref<272x128xf32, #tpu.memory_space<vmem>>, vector<1x16xf32>
    %cst_37 = arith.constant dense<0.000000e+00> : vector<8x16xf32>
    %72 = tpu.matmul %69, %70, %cst_37 {dimension_numbers = #tpu.dot_dimension_numbers<[1], [0], [0], [1], [0, 0, 1, 1], [], []>} : vector<8x8xf32>, vector<8x16xf32>, vector<8x16xf32> -> vector<8x16xf32>
    %73 = vector.broadcast %71 : vector<1x16xf32> to vector<8x16xf32>
    %74 = arith.addf %72, %73 : vector<8x16xf32>
    %cst_38 = arith.constant 0.000000e+00 : f32
    %75 = vector.broadcast %cst_38 : f32 to vector<8x16xf32>
    %76 = arith.maximumf %74, %75 : vector<8x16xf32>
    %c248 = arith.constant 248 : index
    %c0_39 = arith.constant 0 : index
    %77 = vector.load %arg2[%c248, %c0_39] : memref<272x128xf32, #tpu.memory_space<vmem>>, vector<16x32xf32>
    %c264 = arith.constant 264 : index
    %c0_40 = arith.constant 0 : index
    %78 = vector.load %arg2[%c264, %c0_40] : memref<272x128xf32, #tpu.memory_space<vmem>>, vector<1x32xf32>
    %cst_41 = arith.constant dense<0.000000e+00> : vector<8x32xf32>
    %79 = tpu.matmul %76, %77, %cst_41 {dimension_numbers = #tpu.dot_dimension_numbers<[1], [0], [0], [1], [0, 0, 1, 1], [], []>} : vector<8x16xf32>, vector<16x32xf32>, vector<8x32xf32> -> vector<8x32xf32>
    %80 = vector.broadcast %78 : vector<1x32xf32> to vector<8x32xf32>
    %81 = arith.addf %79, %80 : vector<8x32xf32>
    %82 = arith.negf %81 : vector<8x32xf32>
    %83 = math.exp %82 : vector<8x32xf32>
    %cst_42 = arith.constant 1.000000e+00 : f32
    %84 = vector.broadcast %cst_42 : f32 to vector<8x32xf32>
    %85 = arith.addf %84, %83 : vector<8x32xf32>
    %86 = arith.divf %84, %85 : vector<8x32xf32>
    %cst_43 = arith.constant 0.000000e+00 : f32
    %87 = vector.broadcast %cst_43 : f32 to vector<8x32xf32>
    %88 = tpu.concatenate %45, %86, %87 in 1 : vector<8x64xf32>, vector<8x32xf32>, vector<8x32xf32> -> vector<8x128xf32>
    %c0_44 = arith.constant 0 : index
    %c0_45 = arith.constant 0 : index
    %89 = vector.load %arg3[%c0_44, %c0_45] : memref<8x128xf32, #tpu.memory_space<vmem>>, vector<8x128xf32>
    tpu.vector_store %arg3[%c0_44, %c0_45], %88 {strides = array<i32>} : memref<8x128xf32, #tpu.memory_space<vmem>>, vector<8x128xf32>,
    return
  }
  func.func @transform_0(%arg0: i32) -> (i32, i32) {
    %c0_i32 = arith.constant 0 : i32
    %c0_i32_0 = arith.constant 0 : i32
    return %arg0, %c0_i32 : i32, i32
  }
  func.func @transform_1(%arg0: i32) -> (i32, i32) {
    %c0_i32 = arith.constant 0 : i32
    %c0_i32_0 = arith.constant 0 : i32
    %c0_i32_1 = arith.constant 0 : i32
    return %c0_i32, %c0_i32_0 : i32, i32
  }
  func.func @transform_2(%arg0: i32) -> (i32, i32) {
    %c0_i32 = arith.constant 0 : i32
    %c0_i32_0 = arith.constant 0 : i32
    return %arg0, %c0_i32 : i32, i32
  }
}

</mosaic_0001>

<llo_original>
// kernel: network_forward.1
$region0: #{network_forward.1}
  #allocation0 [shape = 'u32[]', space=smem, size = 0x4, offset = 0x4, fixed_abs, tag = 'smem constant byte address 0x4 - core index']
  #allocation1 [shape = 'u32[72,128]{1,0:T(1,128)}', space=vmem, size = 0x9000, scoped, tag = 'internal scratch']
  %s0 = inlined_call_operand.hbm [shape: f32[8,64], index: 0, kind: input, shape index: {}]
  %s1 = inlined_call_operand.hbm [shape: f32[272,128], index: 1, kind: input, shape index: {}]
  %s2 = inlined_call_operand.vmem [shape: f32[8,128], index: 2, kind: output, shape index: {}]
  %s3 = sld [smem:[#allocation0]]
  $region26: #{network_forward.1} parent=0
    _
  %s5 = ssub.s32 1, %s3
  %s6 = scalar_select 0, %s5, %s3
  $region1: #{network_forward.1} parent=0
    #allocation2 [shape = 'u8[4096]{0}', space=vmem, size = 0x1000, scoped, tag = 'input window, operand 0, single buffered']
    #allocation3 [shape = 's32[1]{0}', space=sflag, size = 0x4, scoped, tag = 'scoped memory for network_forward.1']
    #allocation4 [shape = 'u8[139264]{0}', space=vmem, size = 0x22000, scoped, tag = 'input window, operand 1, single buffered']
    #allocation5 [shape = 's32[1]{0}', space=sflag, size = 0x4, scoped, tag = 'scoped memory for network_forward.1']
    %7 = vsyncpa [#allocation3], 0
    %8 = vsyncpa [#allocation5], 0
    // Predicated region
    $region2: #{network_forward.1} parent=1 // pred_check
      _
    $region3: #{network_forward.1} parent=1 // pred_check_branch
      %10 = sbr.rel (0) target = $region5
    $region4: #{network_forward.1} parent=1 // pred_region
      %12 = vsyncadd [#allocation3], 0
      %s14 = sshll.u32 %s0, 4
      %s15 = int_to_ptr.hbm [resolvable:$true] %s14
      %s16 = sshll.u32 [#allocation2], 4
      %s17 = int_to_ptr.vmem [resolvable:$true] %s16
      %19 = dma.hbm_to_vmem [thread:$0]  %s15, 128, %s17, [#allocation3]
    $region5: #{network_forward.1} parent=1 // pred_fallthru
      _
    // Predicated region
    $region6: #{network_forward.1} parent=1 // pred_check
      _
    $region7: #{network_forward.1} parent=1 // pred_check_branch
      %21 = sbr.rel (0) target = $region9
    $region8: #{network_forward.1} parent=1 // pred_region
      %23 = vsyncadd [#allocation5], 0
      %s24 = sshll.u32 %s1, 4
      %s25 = int_to_ptr.hbm [resolvable:$true] %s24
      %s26 = sshll.u32 [#allocation4], 4
      %s27 = int_to_ptr.vmem [resolvable:$true] %s26
      %32 = dma.hbm_to_vmem [thread:$0]  %s25, 4352, %s27, [#allocation5], 128, 128, 8
    $region9: #{network_forward.1} parent=1 // pred_fallthru
      _
    // Predicated region
    $region10: #{network_forward.1} parent=1 // pred_check
      _
    $region11: #{network_forward.1} parent=1 // pred_check_branch
      %34 = sbr.rel (0) target = $region13
    $region12: #{network_forward.1} parent=1 // pred_region
      %36 = dma.done [#allocation3], 128
    $region13: #{network_forward.1} parent=1 // pred_fallthru
      _
    // Predicated region
    $region14: #{network_forward.1} parent=1 // pred_check
      _
    $region15: #{network_forward.1} parent=1 // pred_check_branch
      %38 = sbr.rel (0) target = $region17
    $region16: #{network_forward.1} parent=1 // pred_region
      %40 = dma.done [#allocation5], 4352
    $region17: #{network_forward.1} parent=1 // pred_fallthru
      _
    %v41 = vld [vmem:[#allocation4] sm:$0xff]
    %v42 = vld [vmem:[#allocation4 + $0x8] sm:$0xff]
    %v43 = vld [vmem:[#allocation4 + $0x10] sm:$0xff]
    %v44 = vld [vmem:[#allocation4 + $0x18] sm:$0xff]
    %v45 = vld [vmem:[#allocation4 + $0x20] sm:$0xff]
    %v46 = vld [vmem:[#allocation4 + $0x28] sm:$0xff]
    %v47 = vld [vmem:[#allocation4 + $0x30] sm:$0xff]
    %v48 = vld [vmem:[#allocation4 + $0x38] sm:$0xff]
    %v49 = vld [vmem:[#allocation4 + $0x40] sm:$0x1]
    %v50 = vld [vmem:[#allocation4 + $0x48] sm:$0xff]
    %v51 = vld [vmem:[#allocation4 + $0x50] sm:$0xff]
    %v52 = vld [vmem:[#allocation4 + $0x58] sm:$0xff]
    %v53 = vld [vmem:[#allocation4 + $0x60] sm:$0xff]
    %v54 = vld [vmem:[#allocation4 + $0x68] sm:$0x1]
    %v55 = vld [vmem:[#allocation4 + $0x70] sm:$0xff]
    %v56 = vld [vmem:[#allocation4 + $0x78] sm:$0xff]
    %v57 = vld [vmem:[#allocation4 + $0x80] sm:$0x1]
    %v58 = vld [vmem:[#allocation2] sm:$0xff]
    %v59 = vperm.slane %v49, 0
    %vm60 = vcmask 523264
    %v62 = vsel %vm60, %v58, 0
    %64 = vmatpush.msra.mxu0 0.0
    %65 = vmatpush.msra.mxu0 0.0
    %66 = vmatpush.msra.mxu0 0.0
    %67 = vmatpush.msra.mxu0 0.0
    %68 = vmatpush.msra.mxu0 0.0
    %69 = vmatpush.msra.mxu0 0.0
    %70 = vmatpush.msra.mxu0 0.0
    %71 = vmatpush.msra.mxu0 0.0
    %72 = vmatpush.msra.mxu0 %v48
    %73 = vmatpush.msra.mxu0 %v47
    %74 = vmatpush.msra.mxu0 %v46
    %75 = vmatpush.msra.mxu0 %v45
    %76 = vmatpush.msra.mxu0 %v44
    %77 = vmatpush.msra.mxu0 %v43
    %78 = vmatpush.msra.mxu0 %v42
    %79 = vmatpush.msra.mxu0 %v41
    %80 = vmatmul.f32.gmra.mxu0 %v62
    %v81 = vpop.f32.mrf.mxu0
    %v82 = vadd.f32 %v59, %v81
    %83 = vdwg.mxu0
    %v84 = vmax.f32 %v82, 0.0
    %v85 = vperm.slane %v54, 0
    %vm86 = vcmask 261120
    %v88 = vsel %vm86, %v84, 0
    %90 = vmatpush.msra.mxu0 0.0
    %91 = vmatpush.msra.mxu0 0.0
    %92 = vmatpush.msra.mxu0 0.0
    %93 = vmatpush.msra.mxu0 0.0
    %94 = vmatpush.msra.mxu0 0.0
    %95 = vmatpush.msra.mxu0 0.0
    %96 = vmatpush.msra.mxu0 0.0
    %97 = vmatpush.msra.mxu0 0.0
    %98 = vmatpush.msra.mxu0 0.0
    %99 = vmatpush.msra.mxu0 0.0
    %100 = vmatpush.msra.mxu0 0.0
    %101 = vmatpush.msra.mxu0 0.0
    %102 = vmatpush.msra.mxu0 %v53
    %103 = vmatpush.msra.mxu0 %v52
    %104 = vmatpush.msra.mxu0 %v51
    %105 = vmatpush.msra.mxu0 %v50
    %106 = vmatmul.f32.gmra.mxu0 %v88
    %v107 = vpop.f32.mrf.mxu0
    %v108 = vadd.f32 %v85, %v107
    %109 = vdwg.mxu0
    %v110 = vmax.f32 %v108, 0.0
    %v111 = vperm.slane %v57, 0
    %vm112 = vcmask 130048
    %v114 = vsel %vm112, %v110, 0
    %116 = vmatpush.msra.mxu0 0.0
    %117 = vmatpush.msra.mxu0 0.0
    %118 = vmatpush.msra.mxu0 0.0
    %119 = vmatpush.msra.mxu0 0.0
    %120 = vmatpush.msra.mxu0 0.0
    %121 = vmatpush.msra.mxu0 0.0
    %122 = vmatpush.msra.mxu0 0.0
    %123 = vmatpush.msra.mxu0 0.0
    %124 = vmatpush.msra.mxu0 0.0
    %125 = vmatpush.msra.mxu0 0.0
    %126 = vmatpush.msra.mxu0 0.0
    %127 = vmatpush.msra.mxu0 0.0
    %128 = vmatpush.msra.mxu0 0.0
    %129 = vmatpush.msra.mxu0 0.0
    %130 = vmatpush.msra.mxu0 %v56
    %131 = vmatpush.msra.mxu0 %v55
    %132 = vmatmul.f32.gmra.mxu0 %v114
    %v133 = vpop.f32.mrf.mxu0
    %v134 = vadd.f32 %v111, %v133
    %135 = vdwg.mxu0
    %v136 = vmax.f32 %v134, 0.0
    %v137 = vld [vmem:[#allocation4 + $0x88] sm:$0xff]
    %v138 = vld [vmem:[#allocation4 + $0x90] sm:$0x1]
    %v139 = vperm.slane %v138, 0
    %vm140 = vcmask 64512
    %v142 = vsel %vm140, %v136, 0
    %144 = vmatpush.msra.mxu0 0.0
    %145 = vmatpush.msra.mxu0 0.0
    %146 = vmatpush.msra.mxu0 0.0
    %147 = vmatpush.msra.mxu0 0.0
    %148 = vmatpush.msra.mxu0 0.0
    %149 = vmatpush.msra.mxu0 0.0
    %150 = vmatpush.msra.mxu0 0.0
    %151 = vmatpush.msra.mxu0 0.0
    %152 = vmatpush.msra.mxu0 0.0
    %153 = vmatpush.msra.mxu0 0.0
    %154 = vmatpush.msra.mxu0 0.0
    %155 = vmatpush.msra.mxu0 0.0
    %156 = vmatpush.msra.mxu0 0.0
    %157 = vmatpush.msra.mxu0 0.0
    %158 = vmatpush.msra.mxu0 0.0
    %159 = vmatpush.msra.mxu0 %v137
    %160 = vmatmul.f32.gmra.mxu0 %v142
    %v161 = vpop.f32.mrf.mxu0
    %v162 = vadd.f32 %v139, %v161
    %163 = vdwg.mxu0
    %v164 = vmax.f32 %v162, 0.0
    %v165 = vld [vmem:[#allocation4 + $0x98] sm:$0xff]
    %v166 = vld [vmem:[#allocation4 + $0xa0] sm:$0xff]
    %v167 = vld [vmem:[#allocation4 + $0xa8] sm:$0x1]
    %v168 = vperm.slane %v167, 0
    %v170 = vsel %vm112, %v164, 0
    %172 = vmatpush.msra.mxu0 0.0
    %173 = vmatpush.msra.mxu0 0.0
    %174 = vmatpush.msra.mxu0 0.0
    %175 = vmatpush.msra.mxu0 0.0
    %176 = vmatpush.msra.mxu0 0.0
    %177 = vmatpush.msra.mxu0 0.0
    %178 = vmatpush.msra.mxu0 0.0
    %179 = vmatpush.msra.mxu0 0.0
    %180 = vmatpush.msra.mxu0 0.0
    %181 = vmatpush.msra.mxu0 0.0
    %182 = vmatpush.msra.mxu0 0.0
    %183 = vmatpush.msra.mxu0 0.0
    %184 = vmatpush.msra.mxu0 0.0
    %185 = vmatpush.msra.mxu0 0.0
    %186 = vmatpush.msra.mxu0 %v166
    %187 = vmatpush.msra.mxu0 %v165
    %188 = vmatmul.f32.gmra.mxu0 %v170
    %v189 = vpop.f32.mrf.mxu0
    %v190 = vadd.f32 %v168, %v189
    %191 = vdwg.mxu0
    %v192 = vmax.f32 %v190, 0.0
    %v193 = vld [vmem:[#allocation4 + $0xb0] sm:$0xff]
    %v194 = vld [vmem:[#allocation4 + $0xb8] sm:$0xff]
    %v195 = vld [vmem:[#allocation4 + $0xc0] sm:$0xff]
    %v196 = vld [vmem:[#allocation4 + $0xc8] sm:$0xff]
    %v197 = vld [vmem:[#allocation4 + $0xd0] sm:$0x1]
    %v198 = vperm.slane %v197, 0
    %v200 = vsel %vm86, %v192, 0
    %202 = vmatpush.msra.mxu0 0.0
    %203 = vmatpush.msra.mxu0 0.0
    %204 = vmatpush.msra.mxu0 0.0
    %205 = vmatpush.msra.mxu0 0.0
    %206 = vmatpush.msra.mxu0 0.0
    %207 = vmatpush.msra.mxu0 0.0
    %208 = vmatpush.msra.mxu0 0.0
    %209 = vmatpush.msra.mxu0 0.0
    %210 = vmatpush.msra.mxu0 0.0
    %211 = vmatpush.msra.mxu0 0.0
    %212 = vmatpush.msra.mxu0 0.0
    %213 = vmatpush.msra.mxu0 0.0
    %214 = vmatpush.msra.mxu0 %v196
    %215 = vmatpush.msra.mxu0 %v195
    %216 = vmatpush.msra.mxu0 %v194
    %217 = vmatpush.msra.mxu0 %v193
    %218 = vmatmul.f32.gmra.mxu0 %v200
    %v219 = vpop.f32.mrf.mxu0
    %v220 = vadd.f32 %v198, %v219
    %221 = vdwg.mxu0
    %v222 = vxor.u32 %v220, 2147483648
    %v223 = vmul.f32 %v222, 1.442695
    %v224 = vpow.pop %v223
    %v225 = vadd.f32 %v224, 1.0
    %v226 = vrcp.pop %v225
    %v227 = vmul.f32 %v225, %v226
    %v228 = vsub.f32 1.0, %v227
    %v229 = vmul.f32 %v226, %v228
    %v230 = vadd.f32 %v226, %v229
    %vm231 = vweird.f32 %v225
    %vm232 = vweird.f32 %v226
    %vm233 = vmor %vm231, %vm232
    %v234 = vsel %vm233, %v226, %v230
    %v235 = vand.u32 2147483647, %v225
    %vm236 = vcmp.eq.f32.partialorder %v235, 8.507059e+37
    %v237 = vand.u32 %v225, 2147483648
    %v238 = vor.u32 1.1754944e-38, %v237
    %v239 = vsel %vm236, %v238, %v234
    %v240 = vmul.f32 1.0, %v239
    %v242 = vsel %vm86, %v240, 0
    %244 = vmatpush.msra.mxu0 0.0
    %245 = vmatpush.msra.mxu0 0.0
    %246 = vmatpush.msra.mxu0 0.0
    %247 = vmatpush.msra.mxu0 0.0
    %248 = vmatpush.msra.mxu0 0.0
    %249 = vmatpush.msra.mxu0 0.0
    %250 = vmatpush.msra.mxu0 0.0
    %251 = vmatpush.msra.mxu0 0.0
    %252 = vmatpush.msra.mxu0 0.0
    %253 = vmatpush.msra.mxu0 0.0
    %254 = vmatpush.msra.mxu0 0.0
    %255 = vmatpush.msra.mxu0 0.0
    %256 = vmatpush.msra.mxu0 %v44
    %257 = vmatpush.msra.mxu0 %v43
    %258 = vmatpush.msra.mxu0 %v42
    %259 = vmatpush.msra.mxu0 %v41
    %260 = vmatmul.f32.gmra.mxu0 %v242
    %v261 = vpop.f32.mrf.mxu0
    %v262 = vadd.f32 %v59, %v261
    %263 = vdwg.mxu0
    %v264 = vmax.f32 %v262, 0.0
    %v266 = vsel %vm86, %v264, 0
    %268 = vmatpush.msra.mxu0 0.0
    %269 = vmatpush.msra.mxu0 0.0
    %270 = vmatpush.msra.mxu0 0.0
    %271 = vmatpush.msra.mxu0 0.0
    %272 = vmatpush.msra.mxu0 0.0
    %273 = vmatpush.msra.mxu0 0.0
    %274 = vmatpush.msra.mxu0 0.0
    %275 = vmatpush.msra.mxu0 0.0
    %276 = vmatpush.msra.mxu0 0.0
    %277 = vmatpush.msra.mxu0 0.0
    %278 = vmatpush.msra.mxu0 0.0
    %279 = vmatpush.msra.mxu0 0.0
    %280 = vmatpush.msra.mxu0 %v53
    %281 = vmatpush.msra.mxu0 %v52
    %282 = vmatpush.msra.mxu0 %v51
    %283 = vmatpush.msra.mxu0 %v50
    %284 = vmatmul.f32.gmra.mxu0 %v266
    %v285 = vpop.f32.mrf.mxu0
    %v286 = vadd.f32 %v85, %v285
    %287 = vdwg.mxu0
    %v288 = vmax.f32 %v286, 0.0
    %v290 = vsel %vm112, %v288, 0
    %292 = vmatpush.msra.mxu0 0.0
    %293 = vmatpush.msra.mxu0 0.0
    %294 = vmatpush.msra.mxu0 0.0
    %295 = vmatpush.msra.mxu0 0.0
    %296 = vmatpush.msra.mxu0 0.0
    %297 = vmatpush.msra.mxu0 0.0
    %298 = vmatpush.msra.mxu0 0.0
    %299 = vmatpush.msra.mxu0 0.0
    %300 = vmatpush.msra.mxu0 0.0
    %301 = vmatpush.msra.mxu0 0.0
    %302 = vmatpush.msra.mxu0 0.0
    %303 = vmatpush.msra.mxu0 0.0
    %304 = vmatpush.msra.mxu0 0.0
    %305 = vmatpush.msra.mxu0 0.0
    %306 = vmatpush.msra.mxu0 %v56
    %307 = vmatpush.msra.mxu0 %v55
    %308 = vmatmul.f32.gmra.mxu0 %v290
    %v309 = vpop.f32.mrf.mxu0
    %v310 = vadd.f32 %v111, %v309
    %311 = vdwg.mxu0
    %v312 = vmax.f32 %v310, 0.0
    %v313 = vld [vmem:[#allocation4 + $0xd8] sm:$0xff]
    %v314 = vld [vmem:[#allocation4 + $0xe0] sm:$0x1]
    %v315 = vperm.slane %v314, 0
    %v317 = vsel %vm140, %v312, 0
    %319 = vmatpush.msra.mxu0 0.0
    %320 = vmatpush.msra.mxu0 0.0
    %321 = vmatpush.msra.mxu0 0.0
    %322 = vmatpush.msra.mxu0 0.0
    %323 = vmatpush.msra.mxu0 0.0
    %324 = vmatpush.msra.mxu0 0.0
    %325 = vmatpush.msra.mxu0 0.0
    %326 = vmatpush.msra.mxu0 0.0
    %327 = vmatpush.msra.mxu0 0.0
    %328 = vmatpush.msra.mxu0 0.0
    %329 = vmatpush.msra.mxu0 0.0
    %330 = vmatpush.msra.mxu0 0.0
    %331 = vmatpush.msra.mxu0 0.0
    %332 = vmatpush.msra.mxu0 0.0
    %333 = vmatpush.msra.mxu0 0.0
    %334 = vmatpush.msra.mxu0 %v313
    %335 = vmatmul.f32.gmra.mxu0 %v317
    %v336 = vpop.f32.mrf.mxu0
    %v337 = vadd.f32 %v315, %v336
    %338 = vdwg.mxu0
    %v339 = vmax.f32 %v337, 0.0
    %v340 = vld [vmem:[#allocation4 + $0xe8] sm:$0xff]
    %v341 = vld [vmem:[#allocation4 + $0xf0] sm:$0x1]
    %v342 = vperm.slane %v341, 0
    %v344 = vsel %vm140, %v339, 0
    %346 = vmatpush.msra.mxu0 0.0
    %347 = vmatpush.msra.mxu0 0.0
    %348 = vmatpush.msra.mxu0 0.0
    %349 = vmatpush.msra.mxu0 0.0
    %350 = vmatpush.msra.mxu0 0.0
    %351 = vmatpush.msra.mxu0 0.0
    %352 = vmatpush.msra.mxu0 0.0
    %353 = vmatpush.msra.mxu0 0.0
    %354 = vmatpush.msra.mxu0 0.0
    %355 = vmatpush.msra.mxu0 0.0
    %356 = vmatpush.msra.mxu0 0.0
    %357 = vmatpush.msra.mxu0 0.0
    %358 = vmatpush.msra.mxu0 0.0
    %359 = vmatpush.msra.mxu0 0.0
    %360 = vmatpush.msra.mxu0 0.0
    %361 = vmatpush.msra.mxu0 %v340
    %362 = vmatmul.f32.gmra.mxu0 %v344
    %v363 = vpop.f32.mrf.mxu0
    %v364 = vadd.f32 %v342, %v363
    %365 = vdwg.mxu0
    %v366 = vmax.f32 %v364, 0.0
    %v367 = vld [vmem:[#allocation4 + $0xf8] sm:$0xff]
    %v368 = vld [vmem:[#allocation4 + $0x100] sm:$0xff]
    %v369 = vld [vmem:[#allocation4 + $0x108] sm:$0x1]
    %v370 = vperm.slane %v369, 0
    %v372 = vsel %vm112, %v366, 0
    %374 = vmatpush.msra.mxu0 0.0
    %375 = vmatpush.msra.mxu0 0.0
    %376 = vmatpush.msra.mxu0 0.0
    %377 = vmatpush.msra.mxu0 0.0
    %378 = vmatpush.msra.mxu0 0.0
    %379 = vmatpush.msra.mxu0 0.0
    %380 = vmatpush.msra.mxu0 0.0
    %381 = vmatpush.msra.mxu0 0.0
    %382 = vmatpush.msra.mxu0 0.0
    %383 = vmatpush.msra.mxu0 0.0
    %384 = vmatpush.msra.mxu0 0.0
    %385 = vmatpush.msra.mxu0 0.0
    %386 = vmatpush.msra.mxu0 0.0
    %387 = vmatpush.msra.mxu0 0.0
    %388 = vmatpush.msra.mxu0 %v368
    %389 = vmatpush.msra.mxu0 %v367
    %390 = vmatmul.f32.gmra.mxu0 %v372
    %v391 = vpop.f32.mrf.mxu0
    %v392 = vadd.f32 %v370, %v391
    %393 = vdwg.mxu0
    %v394 = vxor.u32 %v392, 2147483648
    %v395 = vmul.f32 %v394, 1.442695
    %v396 = vpow.pop %v395
    %v397 = vadd.f32 %v396, 1.0
    %v398 = vrcp.pop %v397
    %v399 = vmul.f32 %v397, %v398
    %v400 = vsub.f32 1.0, %v399
    %v401 = vmul.f32 %v398, %v400
    %v402 = vadd.f32 %v398, %v401
    %vm403 = vweird.f32 %v397
    %vm404 = vweird.f32 %v398
    %vm405 = vmor %vm403, %vm404
    %v406 = vsel %vm405, %v398, %v402
    %v407 = vand.u32 2147483647, %v397
    %vm408 = vcmp.eq.f32.partialorder %v407, 8.507059e+37
    %v409 = vand.u32 %v397, 2147483648
    %v410 = vor.u32 1.1754944e-38, %v409
    %v411 = vsel %vm408, %v410, %v406
    %v412 = vmul.f32 1.0, %v411
    %414 = vrot.lane.b32.xlu0 %v412, 64
    %v415 = vpop.permute.xlu0 %414
    %v417 = vsel %vm60, %v240, %v415
    %vm418 = vcmask 785408
    %v419 = vsel %vm418, %v417, 0.0
    %420 = vst [vmem:[%s2] sm:$0xff] %v419
    // Predicated region
    $region18: #{network_forward.1} parent=1 // pred_check
      _
    $region19: #{network_forward.1} parent=1 // pred_check_branch
      %422 = sbr.rel (0) target = $region21
    $region20: #{network_forward.1} parent=1 // pred_region
      _
    $region21: #{network_forward.1} parent=1 // pred_fallthru
      _
    // Predicated region
    $region22: #{network_forward.1} parent=1 // pred_check
      _
    $region23: #{network_forward.1} parent=1 // pred_check_branch
      %424 = sbr.rel (0) target = $region25
    $region24: #{network_forward.1} parent=1 // pred_region
      _
    $region25: #{network_forward.1} parent=1 // pred_fallthru
      _
    %425 = vsyncpa [#allocation3], 1
    %426 = vsyncpa [#allocation5], 1

</llo_original>
